<compile_context>
chip_gen: v6e
topology: v6e:2x2x1
jax: 0.10.0
libtpu: 0.0.40
codegen_flags: <defaults>
</compile_context>

<pallas_src>
import functools

import numpy as np
import jax
import jax.numpy as jnp
from jax import lax
from jax.experimental import pallas as pl
from jax.experimental.pallas import tpu as pltpu


# ----------------------------------------------------------------------------
# Bilinear interpolation matrices (torch F.interpolate, bilinear,
# align_corners=False, antialias=False, scale_factor=1/scale).
# `scale` is the module's integer factor (W // w); PyTorch uses 1/scale_factor
# directly for the coordinate mapping when scale_factor is passed.
# ----------------------------------------------------------------------------
@functools.lru_cache(maxsize=None)
def _interp_matrix(out_size: int, in_size: int, scale: float) -> np.ndarray:
    M = np.zeros((out_size, in_size), dtype=np.float32)
    for i in range(out_size):
        src = (i + 0.5) * scale - 0.5
        src = max(src, 0.0)                       # torch clamps negative src to 0
        i0 = min(int(np.floor(src)), in_size - 1)
        i1 = min(i0 + 1, in_size - 1)
        lam = src - i0
        M[i, i0] += 1.0 - lam
        M[i, i1] += lam
    return M


# ----------------------------------------------------------------------------
# Fused multi-level kernel
# ----------------------------------------------------------------------------
def _make_kernel(level_cfgs, TN, H, W):
    """level_cfgs: list of dicts with static h, w, scale, coef, lh/lwt slots."""
    num_levels = len(level_cfgs)
    needs_interp = any(c["scale"] != 1 for c in level_cfgs)

    def kernel(*refs):
        gt_ref = refs[0]
        pred_refs = refs[1:1 + num_levels]
        mat_refs = refs[1 + num_levels:-1]     # de-duplicated interp matrices
        out_ref = refs[-1]

        gt = gt_ref[...].astype(jnp.float32)           # (TN, H, W)
        gt_flat = gt.reshape(TN * H, W) if needs_interp else None

        acc = jnp.zeros((1, 1, 1), jnp.float32)
        for li, cfg in enumerate(level_cfgs):
            pred = pred_refs[li][...].astype(jnp.float32)   # (TN, h, w)
            h, w = cfg["h"], cfg["w"]
            if cfg["scale"] == 1:
                # identity resize at scale 1 -> skip both matmuls
                diff = pred - gt
            else:
                lh = mat_refs[cfg["lh_slot"]][...]      # (h, H)
                lwt = mat_refs[cfg["lwt_slot"]][...]    # (W, w), carries 1/scale
                # W-downsample first: one big flattened MXU matmul (M = TN*H)
                t1 = jnp.dot(gt_flat, lwt,
                             preferred_element_type=jnp.float32)   # (TN*H, w)
                t1 = t1.reshape(TN, H, w)
                # H-downsample as batched (h,H)@(H,w)
                lh_b = jnp.broadcast_to(lh, (TN, h, H))
                gt_ds = lax.dot_general(
                    lh_b, t1,
                    dimension_numbers=(((2,), (1,)), ((0,), (0,))),
                    preferred_element_type=jnp.float32)             # (TN, h, w)
                diff = pred - gt_ds
            ad = jnp.abs(diff)
            # SmoothL1 (beta = 1.0)
            loss = jnp.where(ad < 1.0, 0.5 * diff * diff, ad - 0.5)
            # coef = weight / (N * h * w)  -> per-level mean * weight, per block
            acc = acc + cfg["coef"] * jnp.sum(loss)
        out_ref[...] = acc

    return kernel


def _choose_tn(N, per_image_bytes, vmem_budget_bytes=8 << 20, target_blocks=4):
    """Largest divisor of N that fits the VMEM budget (blocks are double-buffered)."""
    cap = max(1, int(vmem_budget_bytes) // max(1, int(per_image_bytes)))
    if N >= target_blocks:
        cap = min(cap, max(1, N // target_blocks))
    else:
        cap = min(cap, N)
    tn = 1
    for d in range(1, N + 1):
        if N % d == 0 and d <= cap:
            tn = d
    return tn


def disparity_loss(predicted_disparity_pyramid, gt_disparity,
                   weights=(0.6, 0.8, 1.0, 1.0)):
    """JAX/Pallas equivalent of Disparity_Loss.forward (loss_type='smooth_l1')."""
    B, C, H, W = gt_disparity.shape
    N = B * C
    gt_in = gt_disparity.reshape(N, H, W)

    if not isinstance(predicted_disparity_pyramid, (list, tuple)):
        preds = [predicted_disparity_pyramid]
        weights = [1.0]
    else:
        preds = list(predicted_disparity_pyramid)

    level_cfgs = []
    pred_arrays = []
    mat_slots = {}      # (kind, out, in, scale) -> slot index
    mat_arrays = []     # np matrices in slot order
    for idx, pred in enumerate(preds):
        h, w = int(pred.shape[-2]), int(pred.shape[-1])
        # TODO(synk): scale derived from W only (as in the PyTorch module);
        # assumes an integer factor applied to both spatial dims.
        scale = W // w
        cfg = dict(h=h, w=w, scale=scale,
                   coef=float(weights[idx]) / float(N * h * w))
        pred_arrays.append(pred.reshape(N, h, w))
        if scale != 1:
            lh_key = ("h", h, H, scale)
            if lh_key not in mat_slots:
                mat_slots[lh_key] = len(mat_arrays)
                mat_arrays.append(_interp_matrix(h, H, float(scale)))         # (h, H)
            lwt_key = ("w", w, W, scale)
            if lwt_key not in mat_slots:
                mat_slots[lwt_key] = len(mat_arrays)
                # fold the module's * (1/scale) into the W matrix
                mat_arrays.append(_interp_matrix(w, W, float(scale)).T
                                  * np.float32(1.0 / scale))                  # (W, w)
            cfg["lh_slot"] = mat_slots[lh_key]
            cfg["lwt_slot"] = mat_slots[lwt_key]
        level_cfgs.append(cfg)

    # VMEM budget: inputs (gt + preds) plus per-level matmul temporaries.
    per_image_bytes = 4 * (H * W
                           + sum(c["h"] * c["w"] for c in level_cfgs)
                           + sum(H * c["w"] + c["h"] * H
                                 for c in level_cfgs if c["scale"] != 1))
    TN = _choose_tn(N, per_image_bytes)
    num_blocks = N // TN

    kernel = _make_kernel(level_cfgs, TN, H, W)

    in_specs = [pl.BlockSpec((TN, H, W), lambda b: (b, 0, 0))]
    for cfg in level_cfgs:
        in_specs.append(
            pl.BlockSpec((TN, cfg["h"], cfg["w"]), lambda b: (b, 0, 0)))
    interp_arrays = []
    for m in mat_arrays:
        in_specs.append(pl.BlockSpec(m.shape, lambda b: (0, 0)))
        interp_arrays.append(jnp.asarray(m))

    partials = pl.pallas_call(
        kernel,
        out_shape=jax.ShapeDtypeStruct((num_blocks, 1, 1), jnp.float32),
        grid_spec=pltpu.PrefetchScalarGridSpec(
            num_scalar_prefetch=0,
            grid=(num_blocks,),
            in_specs=in_specs,
            out_specs=pl.BlockSpec((1, 1, 1), lambda b: (b, 0, 0)),
        ),
        compiler_params=pltpu.CompilerParams(
            dimension_semantics=("parallel",),
            vmem_limit_bytes=32 * 1024 * 1024,
        ),
    )(gt_in, *pred_arrays, *interp_arrays)

    # Final cross-block reduction outside the kernel (per-block f32 partials).
    return jnp.sum(partials)


# ----------------------------------------------------------------------------
# Independent numpy reference (direct per-pixel bilinear gather, float64)
# ----------------------------------------------------------------------------
def _bilinear_downsample_np(x, out_h, out_w, scale):
    N, H, W = x.shape
    out = np.zeros((N, out_h, out_w), dtype=np.float64)
    for i in range(out_h):
        sy = max((i + 0.5) * scale - 0.5, 0.0)
        y0 = min(int(np.floor(sy)), H - 1)
        y1 = min(y0 + 1, H - 1)
        wy = sy - y0
        for j in range(out_w):
            sx = max((j + 0.5) * scale - 0.5, 0.0)
            x0 = min(int(np.floor(sx)), W - 1)
            x1 = min(x0 + 1, W - 1)
            wx = sx - x0
            out[:, i, j] = ((1 - wy) * (1 - wx) * x[:, y0, x0]
                            + (1 - wy) * wx * x[:, y0, x1]
                            + wy * (1 - wx) * x[:, y1, x0]
                            + wy * wx * x[:, y1, x1])
    return out


def _smooth_l1_mean_np(pred, target):
    d = pred - target
    ad = np.abs(d)
    return float(np.mean(np.where(ad < 1.0, 0.5 * d * d, ad - 0.5)))


def _reference_loss_np(pred_pyramid, gt, weights):
    gt_np = np.asarray(gt, dtype=np.float64)
    B, C, H, W = gt_np.shape
    gt_flat = gt_np.reshape(B * C, H, W)
    total = 0.0
    for idx, pred in enumerate(pred_pyramid):
        p = np.asarray(pred, dtype=np.float64)
        h, w = p.shape[-2], p.shape[-1]
        scale = W // w
        if scale == 1:
            gt_ds = gt_flat
        else:
            gt_ds = _bilinear_downsample_np(gt_flat, h, w, float(scale)) * (1.0 / scale)
        total += weights[idx] * _smooth_l1_mean_np(p.reshape(B * C, h, w), gt_ds)
    return total


if __name__ == "__main__":
    key = jax.random.PRNGKey(0)
    B, C, H, W = 2, 4, 16, 16
    k_gt, k0, k1, k2, k3 = jax.random.split(key, 5)

    gt = jax.random.uniform(k_gt, (B, C, H, W), jnp.float32) * 4.0
    scales = [4, 2, 1, 1]                  # pyramid: 4x4, 8x8, 16x16, 16x16
    pred_keys = [k0, k1, k2, k3]
    preds = [
        jax.random.uniform(kk, (B, C, H // s, W // s), jnp.float32) * (4.0 / s)
        for s, kk in zip(scales, pred_keys)
    ]
    weights = [0.6, 0.8, 1.0, 1.0]

    # pyramid (list) branch
    loss = disparity_loss(preds, gt, weights)
    loss = jax.block_until_ready(loss)
    ref = _reference_loss_np(preds, gt, weights)
    np.testing.assert_allclose(np.asarray(loss), ref, rtol=1e-4, atol=1e-5)

    # single-tensor branch (same spatial size as gt)
    loss_single = disparity_loss(preds[-1], gt)
    loss_single = jax.block_until_ready(loss_single)
    ref_single = _reference_loss_np([preds[-1]], gt, [1.0])
    np.testing.assert_allclose(np.asarray(loss_single), ref_single,
                               rtol=1e-4, atol=1e-5)

    print("KERNEL_OK")
</pallas_src>

<mosaic_0001>
module attributes {stable_mosaic.version = 11 : i64} {
  func.func @kernel(%arg0: i32, %arg1: memref<2x16x16xf32, #tpu.memory_space<vmem>>, %arg2: memref<2x4x4xf32, #tpu.memory_space<vmem>>, %arg3: memref<2x8x8xf32, #tpu.memory_space<vmem>>, %arg4: memref<2x16x16xf32, #tpu.memory_space<vmem>>, %arg5: memref<2x16x16xf32, #tpu.memory_space<vmem>>, %arg6: memref<4x16xf32, #tpu.memory_space<vmem>>, %arg7: memref<16x4xf32, #tpu.memory_space<vmem>>, %arg8: memref<8x16xf32, #tpu.memory_space<vmem>>, %arg9: memref<16x8xf32, #tpu.memory_space<vmem>>, %arg10: memref<1x1x1xf32, #tpu.memory_space<vmem>>) attributes {dimension_semantics = [#tpu.dimension_semantics<parallel>], iteration_bounds = array<i64: 4>, scalar_prefetch = 0 : i64, scratch_operands = 0 : i64, tpu.core_type = #tpu.core_type<tc>, window_params = [{transform_indices = @transform_0, window_bounds = array<i64: 2, 16, 16>}, {transform_indices = @transform_1, window_bounds = array<i64: 2, 4, 4>}, {transform_indices = @transform_2, window_bounds = array<i64: 2, 8, 8>}, {transform_indices = @transform_3, window_bounds = array<i64: 2, 16, 16>}, {transform_indices = @transform_4, window_bounds = array<i64: 2, 16, 16>}, {pipeline_mode = #tpu.pipeline_mode<synchronous>, transform_indices = @transform_5, window_bounds = array<i64: 4, 16>}, {pipeline_mode = #tpu.pipeline_mode<synchronous>, transform_indices = @transform_6, window_bounds = array<i64: 16, 4>}, {pipeline_mode = #tpu.pipeline_mode<synchronous>, transform_indices = @transform_7, window_bounds = array<i64: 8, 16>}, {pipeline_mode = #tpu.pipeline_mode<synchronous>, transform_indices = @transform_8, window_bounds = array<i64: 16, 8>}, {transform_indices = @transform_9, window_bounds = array<i64: 1, 1, 1>}]} {
    %c0 = arith.constant 0 : index
    %c0_0 = arith.constant 0 : index
    %c0_1 = arith.constant 0 : index
    %0 = vector.load %arg1[%c0, %c0_0, %c0_1] : memref<2x16x16xf32, #tpu.memory_space<vmem>>, vector<2x16x16xf32>
    %1 = vector.shape_cast %0 : vector<2x16x16xf32> to vector<32x16xf32>
    %cst = arith.constant 0.000000e+00 : f32
    %2 = vector.broadcast %cst : f32 to vector<1x1x1xf32>
    %c0_2 = arith.constant 0 : index
    %c0_3 = arith.constant 0 : index
    %c0_4 = arith.constant 0 : index
    %3 = vector.load %arg2[%c0_2, %c0_3, %c0_4] : memref<2x4x4xf32, #tpu.memory_space<vmem>>, vector<2x4x4xf32>
    %c0_5 = arith.constant 0 : index
    %c0_6 = arith.constant 0 : index
    %4 = vector.load %arg6[%c0_5, %c0_6] : memref<4x16xf32, #tpu.memory_space<vmem>>, vector<4x16xf32>
    %c0_7 = arith.constant 0 : index
    %c0_8 = arith.constant 0 : index
    %5 = vector.load %arg7[%c0_7, %c0_8] : memref<16x4xf32, #tpu.memory_space<vmem>>, vector<16x4xf32>
    %cst_9 = arith.constant dense<0.000000e+00> : vector<32x4xf32>
    %6 = tpu.matmul %1, %5, %cst_9 {dimension_numbers = #tpu.dot_dimension_numbers<[1], [0], [0], [1], [0, 0, 1, 1], [], []>} : vector<32x16xf32>, vector<16x4xf32>, vector<32x4xf32> -> vector<32x4xf32>
    %7 = vector.shape_cast %6 : vector<32x4xf32> to vector<2x16x4xf32>
    %8 = vector.shape_cast %4 : vector<4x16xf32> to vector<1x4x16xf32>
    %9 = vector.broadcast %8 : vector<1x4x16xf32> to vector<2x4x16xf32>
    %cst_10 = arith.constant dense<0.000000e+00> : vector<2x4x4xf32>
    %10 = tpu.matmul %9, %7, %cst_10 {dimension_numbers = #tpu.dot_dimension_numbers<[2], [1], [1], [2], [0, 0, 0, 1, 1, 2], [0], [0]>} : vector<2x4x16xf32>, vector<2x16x4xf32>, vector<2x4x4xf32> -> vector<2x4x4xf32>
    %11 = arith.subf %3, %10 : vector<2x4x4xf32>
    %12 = math.absf %11 : vector<2x4x4xf32>
    %cst_11 = arith.constant 1.000000e+00 : f32
    %13 = vector.broadcast %cst_11 : f32 to vector<2x4x4xf32>
    %14 = arith.cmpf olt, %12, %13 : vector<2x4x4xf32>
    %cst_12 = arith.constant 5.000000e-01 : f32
    %15 = vector.broadcast %cst_12 : f32 to vector<2x4x4xf32>
    %16 = arith.mulf %15, %11 : vector<2x4x4xf32>
    %17 = arith.mulf %16, %11 : vector<2x4x4xf32>
    %cst_13 = arith.constant 5.000000e-01 : f32
    %18 = vector.broadcast %cst_13 : f32 to vector<2x4x4xf32>
    %19 = arith.subf %12, %18 : vector<2x4x4xf32>
    %20 = arith.select %14, %17, %19 : vector<2x4x4xi1>, vector<2x4x4xf32>
    %21 = vector.shape_cast %20 : vector<2x4x4xf32> to vector<1x2x4x4xf32>
    %cst_14 = arith.constant dense<0.000000e+00> : vector<1xf32>
    %22 = vector.multi_reduction <add>, %21, %cst_14 [1, 2, 3] : vector<1x2x4x4xf32> to vector<1xf32>
    %23 = vector.shape_cast %22 : vector<1xf32> to vector<1x1x1x1xf32>
    %24 = vector.extract %23[0, 0, 0, 0] : f32 from vector<1x1x1x1xf32>
    %cst_15 = arith.constant 4.687500e-03 : f32
    %25 = arith.mulf %cst_15, %24 : f32
    %26 = vector.broadcast %25 : f32 to vector<1x1x1xf32>
    %27 = arith.addf %2, %26 : vector<1x1x1xf32>
    %c0_16 = arith.constant 0 : index
    %c0_17 = arith.constant 0 : index
    %c0_18 = arith.constant 0 : index
    %28 = vector.load %arg3[%c0_16, %c0_17, %c0_18] : memref<2x8x8xf32, #tpu.memory_space<vmem>>, vector<2x8x8xf32>
    %c0_19 = arith.constant 0 : index
    %c0_20 = arith.constant 0 : index
    %29 = vector.load %arg8[%c0_19, %c0_20] : memref<8x16xf32, #tpu.memory_space<vmem>>, vector<8x16xf32>
    %c0_21 = arith.constant 0 : index
    %c0_22 = arith.constant 0 : index
    %30 = vector.load %arg9[%c0_21, %c0_22] : memref<16x8xf32, #tpu.memory_space<vmem>>, vector<16x8xf32>
    %cst_23 = arith.constant dense<0.000000e+00> : vector<32x8xf32>
    %31 = tpu.matmul %1, %30, %cst_23 {dimension_numbers = #tpu.dot_dimension_numbers<[1], [0], [0], [1], [0, 0, 1, 1], [], []>} : vector<32x16xf32>, vector<16x8xf32>, vector<32x8xf32> -> vector<32x8xf32>
    %32 = vector.shape_cast %31 : vector<32x8xf32> to vector<2x16x8xf32>
    %33 = vector.shape_cast %29 : vector<8x16xf32> to vector<1x8x16xf32>
    %34 = vector.broadcast %33 : vector<1x8x16xf32> to vector<2x8x16xf32>
    %cst_24 = arith.constant dense<0.000000e+00> : vector<2x8x8xf32>
    %35 = tpu.matmul %34, %32, %cst_24 {dimension_numbers = #tpu.dot_dimension_numbers<[2], [1], [1], [2], [0, 0, 0, 1, 1, 2], [0], [0]>} : vector<2x8x16xf32>, vector<2x16x8xf32>, vector<2x8x8xf32> -> vector<2x8x8xf32>
    %36 = arith.subf %28, %35 : vector<2x8x8xf32>
    %37 = math.absf %36 : vector<2x8x8xf32>
    %cst_25 = arith.constant 1.000000e+00 : f32
    %38 = vector.broadcast %cst_25 : f32 to vector<2x8x8xf32>
    %39 = arith.cmpf olt, %37, %38 : vector<2x8x8xf32>
    %cst_26 = arith.constant 5.000000e-01 : f32
    %40 = vector.broadcast %cst_26 : f32 to vector<2x8x8xf32>
    %41 = arith.mulf %40, %36 : vector<2x8x8xf32>
    %42 = arith.mulf %41, %36 : vector<2x8x8xf32>
    %cst_27 = arith.constant 5.000000e-01 : f32
    %43 = vector.broadcast %cst_27 : f32 to vector<2x8x8xf32>
    %44 = arith.subf %37, %43 : vector<2x8x8xf32>
    %45 = arith.select %39, %42, %44 : vector<2x8x8xi1>, vector<2x8x8xf32>
    %46 = vector.shape_cast %45 : vector<2x8x8xf32> to vector<1x2x8x8xf32>
    %cst_28 = arith.constant dense<0.000000e+00> : vector<1xf32>
    %47 = vector.multi_reduction <add>, %46, %cst_28 [1, 2, 3] : vector<1x2x8x8xf32> to vector<1xf32>
    %48 = vector.shape_cast %47 : vector<1xf32> to vector<1x1x1x1xf32>
    %49 = vector.extract %48[0, 0, 0, 0] : f32 from vector<1x1x1x1xf32>
    %cst_29 = arith.constant 1.562500e-03 : f32
    %50 = arith.mulf %cst_29, %49 : f32
    %51 = vector.broadcast %50 : f32 to vector<1x1x1xf32>
    %52 = arith.addf %27, %51 : vector<1x1x1xf32>
    %c0_30 = arith.constant 0 : index
    %c0_31 = arith.constant 0 : index
    %c0_32 = arith.constant 0 : index
    %53 = vector.load %arg4[%c0_30, %c0_31, %c0_32] : memref<2x16x16xf32, #tpu.memory_space<vmem>>, vector<2x16x16xf32>
    %54 = arith.subf %53, %0 : vector<2x16x16xf32>
    %55 = math.absf %54 : vector<2x16x16xf32>
    %cst_33 = arith.constant 1.000000e+00 : f32
    %56 = vector.broadcast %cst_33 : f32 to vector<2x16x16xf32>
    %57 = arith.cmpf olt, %55, %56 : vector<2x16x16xf32>
    %cst_34 = arith.constant 5.000000e-01 : f32
    %58 = vector.broadcast %cst_34 : f32 to vector<2x16x16xf32>
    %59 = arith.mulf %58, %54 : vector<2x16x16xf32>
    %60 = arith.mulf %59, %54 : vector<2x16x16xf32>
    %cst_35 = arith.constant 5.000000e-01 : f32
    %61 = vector.broadcast %cst_35 : f32 to vector<2x16x16xf32>
    %62 = arith.subf %55, %61 : vector<2x16x16xf32>
    %63 = arith.select %57, %60, %62 : vector<2x16x16xi1>, vector<2x16x16xf32>
    %64 = vector.shape_cast %63 : vector<2x16x16xf32> to vector<1x2x16x16xf32>
    %cst_36 = arith.constant dense<0.000000e+00> : vector<1xf32>
    %65 = vector.multi_reduction <add>, %64, %cst_36 [1, 2, 3] : vector<1x2x16x16xf32> to vector<1xf32>
    %66 = vector.shape_cast %65 : vector<1xf32> to vector<1x1x1x1xf32>
    %67 = vector.extract %66[0, 0, 0, 0] : f32 from vector<1x1x1x1xf32>
    %cst_37 = arith.constant 4.8828125E-4 : f32
    %68 = arith.mulf %cst_37, %67 : f32
    %69 = vector.broadcast %68 : f32 to vector<1x1x1xf32>
    %70 = arith.addf %52, %69 : vector<1x1x1xf32>
    %c0_38 = arith.constant 0 : index
    %c0_39 = arith.constant 0 : index
    %c0_40 = arith.constant 0 : index
    %71 = vector.load %arg5[%c0_38, %c0_39, %c0_40] : memref<2x16x16xf32, #tpu.memory_space<vmem>>, vector<2x16x16xf32>
    %72 = arith.subf %71, %0 : vector<2x16x16xf32>
    %73 = math.absf %72 : vector<2x16x16xf32>
    %cst_41 = arith.constant 1.000000e+00 : f32
    %74 = vector.broadcast %cst_41 : f32 to vector<2x16x16xf32>
    %75 = arith.cmpf olt, %73, %74 : vector<2x16x16xf32>
    %cst_42 = arith.constant 5.000000e-01 : f32
    %76 = vector.broadcast %cst_42 : f32 to vector<2x16x16xf32>
    %77 = arith.mulf %76, %72 : vector<2x16x16xf32>
    %78 = arith.mulf %77, %72 : vector<2x16x16xf32>
    %cst_43 = arith.constant 5.000000e-01 : f32
    %79 = vector.broadcast %cst_43 : f32 to vector<2x16x16xf32>
    %80 = arith.subf %73, %79 : vector<2x16x16xf32>
    %81 = arith.select %75, %78, %80 : vector<2x16x16xi1>, vector<2x16x16xf32>
    %82 = vector.shape_cast %81 : vector<2x16x16xf32> to vector<1x2x16x16xf32>
    %cst_44 = arith.constant dense<0.000000e+00> : vector<1xf32>
    %83 = vector.multi_reduction <add>, %82, %cst_44 [1, 2, 3] : vector<1x2x16x16xf32> to vector<1xf32>
    %84 = vector.shape_cast %83 : vector<1xf32> to vector<1x1x1x1xf32>
    %85 = vector.extract %84[0, 0, 0, 0] : f32 from vector<1x1x1x1xf32>
    %cst_45 = arith.constant 4.8828125E-4 : f32
    %86 = arith.mulf %cst_45, %85 : f32
    %87 = vector.broadcast %86 : f32 to vector<1x1x1xf32>
    %88 = arith.addf %70, %87 : vector<1x1x1xf32>
    %c0_46 = arith.constant 0 : index
    %c0_47 = arith.constant 0 : index
    %c0_48 = arith.constant 0 : index
    %89 = vector.load %arg10[%c0_46, %c0_47, %c0_48] : memref<1x1x1xf32, #tpu.memory_space<vmem>>, vector<1x1x1xf32>
    tpu.vector_store %arg10[%c0_46, %c0_47, %c0_48], %88 {strides = array<i32>} : memref<1x1x1xf32, #tpu.memory_space<vmem>>, vector<1x1x1xf32>,
    return
  }
  func.func @transform_0(%arg0: i32) -> (i32, i32, i32) {
    %c0_i32 = arith.constant 0 : i32
    %c0_i32_0 = arith.constant 0 : i32
    %c0_i32_1 = arith.constant 0 : i32
    return %arg0, %c0_i32, %c0_i32_0 : i32, i32, i32
  }
  func.func @transform_1(%arg0: i32) -> (i32, i32, i32) {
    %c0_i32 = arith.constant 0 : i32
    %c0_i32_0 = arith.constant 0 : i32
    %c0_i32_1 = arith.constant 0 : i32
    return %arg0, %c0_i32, %c0_i32_0 : i32, i32, i32
  }
  func.func @transform_2(%arg0: i32) -> (i32, i32, i32) {
    %c0_i32 = arith.constant 0 : i32
    %c0_i32_0 = arith.constant 0 : i32
    %c0_i32_1 = arith.constant 0 : i32
    return %arg0, %c0_i32, %c0_i32_0 : i32, i32, i32
  }
  func.func @transform_3(%arg0: i32) -> (i32, i32, i32) {
    %c0_i32 = arith.constant 0 : i32
    %c0_i32_0 = arith.constant 0 : i32
    %c0_i32_1 = arith.constant 0 : i32
    return %arg0, %c0_i32, %c0_i32_0 : i32, i32, i32
  }
  func.func @transform_4(%arg0: i32) -> (i32, i32, i32) {
    %c0_i32 = arith.constant 0 : i32
    %c0_i32_0 = arith.constant 0 : i32
    %c0_i32_1 = arith.constant 0 : i32
    return %arg0, %c0_i32, %c0_i32_0 : i32, i32, i32
  }
  func.func @transform_5(%arg0: i32) -> (i32, i32) {
    %c0_i32 = arith.constant 0 : i32
    %c0_i32_0 = arith.constant 0 : i32
    %c0_i32_1 = arith.constant 0 : i32
    return %c0_i32, %c0_i32_0 : i32, i32
  }
  func.func @transform_6(%arg0: i32) -> (i32, i32) {
    %c0_i32 = arith.constant 0 : i32
    %c0_i32_0 = arith.constant 0 : i32
    %c0_i32_1 = arith.constant 0 : i32
    return %c0_i32, %c0_i32_0 : i32, i32
  }
  func.func @transform_7(%arg0: i32) -> (i32, i32) {
    %c0_i32 = arith.constant 0 : i32
    %c0_i32_0 = arith.constant 0 : i32
    %c0_i32_1 = arith.constant 0 : i32
    return %c0_i32, %c0_i32_0 : i32, i32
  }
  func.func @transform_8(%arg0: i32) -> (i32, i32) {
    %c0_i32 = arith.constant 0 : i32
    %c0_i32_0 = arith.constant 0 : i32
    %c0_i32_1 = arith.constant 0 : i32
    return %c0_i32, %c0_i32_0 : i32, i32
  }
  func.func @transform_9(%arg0: i32) -> (i32, i32, i32) {
    %c0_i32 = arith.constant 0 : i32
    %c0_i32_0 = arith.constant 0 : i32
    %c0_i32_1 = arith.constant 0 : i32
    return %arg0, %c0_i32, %c0_i32_0 : i32, i32, i32
  }
}

</mosaic_0001>

<llo_original>
// kernel: tpu_custom_call.1
$region0: #{tpu_custom_call.1}
  #allocation0 [shape = 'u32[]', space=smem, size = 0x4, offset = 0x4, fixed_abs, tag = 'smem constant byte address 0x4 - core index']
  #allocation1 [shape = 'u32[144,128]{1,0:T(1,128)}', space=vmem, size = 0x12000, scoped, tag = 'internal scratch']
  %s0 = inlined_call_operand.hbm [shape: f32[8,16,16], index: 0, kind: input, shape index: {}]
  %s1 = inlined_call_operand.vmem [shape: f32[8,4,4], index: 1, kind: input, shape index: {}]
  %s2 = inlined_call_operand.vmem [shape: f32[8,8,8], index: 2, kind: input, shape index: {}]
  %s3 = inlined_call_operand.hbm [shape: f32[8,16,16], index: 3, kind: input, shape index: {}]
  %s4 = inlined_call_operand.hbm [shape: f32[8,16,16], index: 4, kind: input, shape index: {}]
  %s5 = inlined_call_operand.vmem [shape: f32[4,16], index: 5, kind: input, shape index: {}]
  %s6 = inlined_call_operand.vmem [shape: f32[16,4], index: 6, kind: input, shape index: {}]
  %s7 = inlined_call_operand.vmem [shape: f32[8,16], index: 7, kind: input, shape index: {}]
  %s8 = inlined_call_operand.vmem [shape: f32[16,8], index: 8, kind: input, shape index: {}]
  %s9 = inlined_call_operand.vmem [shape: f32[4,1,1], index: 9, kind: output, shape index: {}]
  %s10 = sld [smem:[#allocation0]]
  $region81: #{tpu_custom_call.1} parent=0
    _
  %s12 = ssub.s32 1, %s10
  %s13 = scalar_select 0, %s12, %s10
  $region1: #{tpu_custom_call.1} parent=0
    #allocation2 [shape = 'u8[32768]{0}', space=vmem, size = 0x8000, scoped, tag = 'input window, operand 0']
    #allocation3 [shape = 's32[2]{0}', space=sflag, size = 0x8, scoped, tag = 'scoped memory for tpu_custom_call.1']
    #allocation4 [shape = 'u8[32768]{0}', space=vmem, size = 0x8000, scoped, tag = 'input window, operand 3']
    #allocation5 [shape = 's32[2]{0}', space=sflag, size = 0x8, scoped, tag = 'scoped memory for tpu_custom_call.1']
    #allocation6 [shape = 'u8[32768]{0}', space=vmem, size = 0x8000, scoped, tag = 'input window, operand 4']
    %14 = vsyncpa [#allocation3], 0
    %s15 = scalar_lea.sflag [#allocation3], 1
    %16 = vsyncpa %s15, 0
    %17 = vsyncpa [#allocation5], 0
    %s18 = scalar_lea.sflag [#allocation5], 1
    %19 = vsyncpa %s18, 0
    loop: start=0, step=1, limit=6
    $region2: #{tpu_custom_call.1} parent=1 // loop_pre_header
      _
    $region3: #{tpu_custom_call.1} parent=1 // loop_header
      %s21 = sphi 0, %s25
      %p22 = scmp.ge.s32.totalorder %s21, 6
      %s31 = sphi 0, %s33
      %s34 = sphi 0, %s31
      %s35 = sphi 0, %s34
      %s51 = sphi 0, %s35
      %s57 = sphi 0, %s59
      %s60 = sphi 0, %s57
      %s61 = sphi 0, %s60
      %s77 = sphi 0, %s61
      %s83 = sphi 0, %s85
      %s86 = sphi 0, %s83
      %s87 = sphi 0, %s86
      %s103 = sphi 0, %s87
      %s109 = sphi 0, %s111
      %s112 = sphi 0, %s109
      %s113 = sphi 0, %s112
      %s129 = sphi 0, %s113
      %s135 = sphi 0, %s137
      %s138 = sphi 0, %s135
      %s139 = sphi 0, %s138
      %s155 = sphi 0, %s139
      %s159 = sphi 0, %s159
      %s161 = sphi 0, %s159
      %s162 = sphi 0, %s161
      %s176 = sphi 0, %s162
      %s180 = sphi 0, %s180
      %s182 = sphi 0, %s180
      %s183 = sphi 0, %s182
      %s197 = sphi 0, %s183
      %s201 = sphi 0, %s201
      %s203 = sphi 0, %s201
      %s204 = sphi 0, %s203
      %s218 = sphi 0, %s204
      %s222 = sphi 0, %s222
      %s224 = sphi 0, %s222
      %s225 = sphi 0, %s224
      %s239 = sphi 0, %s225
      %s245 = sphi 0, %s247
      %s248 = sphi 0, %s245
      %s249 = sphi 0, %s248
      %s265 = sphi 0, %s249
    $region4: #{tpu_custom_call.1} parent=1 // loop_header_branch
      %24 = sbr.rel (%p22) target = $region8
    $region5: #{tpu_custom_call.1} parent=1 // loop_body
      %s26 = ssub.s32 %s21, 1
      %s27 = ssub.s32 %s21, 2
      %s28 = sadd.s32 %s21, 1
      %s29 = ssub.s32 %s21, %s28
      %p30 = scmp.eq.s32.totalorder %s29, 0
      %s32 = sadd.s32 %s31, 1
      %s33 = scalar_select %p30, %s31, %s32
      %p36 = pneg %p30
      %p37 = scmp.eq.s32.totalorder %s21, 3
      %p38 = por %p36, %p37
      %p39 = scmp.ne.s32.totalorder %s31, %s34
      %p40 = scmp.eq.s32.totalorder %s21, 0
      %p41 = por %p39, %p40
      %p42 = scmp.ne.s32.totalorder %s31, %s34
      %p43 = scmp.eq.s32.totalorder %s26, 3
      %p44 = por %p42, %p43
      %p45 = scmp.ne.s32.totalorder %s34, %s35
      %p46 = scmp.eq.s32.totalorder %s26, 0
      %p47 = por %p45, %p46
      %p48 = scmp.ne.s32.totalorder %s34, %s35
      %p49 = scmp.eq.s32.totalorder %s27, 3
      %p50 = por %p48, %p49
      %p52 = scmp.ne.s32.totalorder %s35, %s51
      %p53 = scmp.eq.s32.totalorder %s27, 0
      %p54 = por %p52, %p53
      %s55 = ssub.s32 %s21, %s28
      %p56 = scmp.eq.s32.totalorder %s55, 0
      %s58 = sadd.s32 %s57, 1
      %s59 = scalar_select %p56, %s57, %s58
      %p62 = pneg %p56
      %p63 = scmp.eq.s32.totalorder %s21, 3
      %p64 = por %p62, %p63
      %p65 = scmp.ne.s32.totalorder %s57, %s60
      %p66 = scmp.eq.s32.totalorder %s21, 0
      %p67 = por %p65, %p66
      %p68 = scmp.ne.s32.totalorder %s57, %s60
      %p69 = scmp.eq.s32.totalorder %s26, 3
      %p70 = por %p68, %p69
      %p71 = scmp.ne.s32.totalorder %s60, %s61
      %p72 = scmp.eq.s32.totalorder %s26, 0
      %p73 = por %p71, %p72
      %p74 = scmp.ne.s32.totalorder %s60, %s61
      %p75 = scmp.eq.s32.totalorder %s27, 3
      %p76 = por %p74, %p75
      %p78 = scmp.ne.s32.totalorder %s61, %s77
      %p79 = scmp.eq.s32.totalorder %s27, 0
      %p80 = por %p78, %p79
      %s81 = ssub.s32 %s21, %s28
      %p82 = scmp.eq.s32.totalorder %s81, 0
      %s84 = sadd.s32 %s83, 1
      %s85 = scalar_select %p82, %s83, %s84
      %p88 = pneg %p82
      %p89 = scmp.eq.s32.totalorder %s21, 3
      %p90 = por %p88, %p89
      %p91 = scmp.ne.s32.totalorder %s83, %s86
      %p92 = scmp.eq.s32.totalorder %s21, 0
      %p93 = por %p91, %p92
      %p94 = scmp.ne.s32.totalorder %s83, %s86
      %p95 = scmp.eq.s32.totalorder %s26, 3
      %p96 = por %p94, %p95
      %p97 = scmp.ne.s32.totalorder %s86, %s87
      %p98 = scmp.eq.s32.totalorder %s26, 0
      %p99 = por %p97, %p98
      %p100 = scmp.ne.s32.totalorder %s86, %s87
      %p101 = scmp.eq.s32.totalorder %s27, 3
      %p102 = por %p100, %p101
      %p104 = scmp.ne.s32.totalorder %s87, %s103
      %p105 = scmp.eq.s32.totalorder %s27, 0
      %p106 = por %p104, %p105
      %s107 = ssub.s32 %s21, %s28
      %p108 = scmp.eq.s32.totalorder %s107, 0
      %s110 = sadd.s32 %s109, 1
      %s111 = scalar_select %p108, %s109, %s110
      %p114 = pneg %p108
      %p115 = scmp.eq.s32.totalorder %s21, 3
      %p116 = por %p114, %p115
      %p117 = scmp.ne.s32.totalorder %s109, %s112
      %p118 = scmp.eq.s32.totalorder %s21, 0
      %p119 = por %p117, %p118
      %p120 = scmp.ne.s32.totalorder %s109, %s112
      %p121 = scmp.eq.s32.totalorder %s26, 3
      %p122 = por %p120, %p121
      %p123 = scmp.ne.s32.totalorder %s112, %s113
      %p124 = scmp.eq.s32.totalorder %s26, 0
      %p125 = por %p123, %p124
      %p126 = scmp.ne.s32.totalorder %s112, %s113
      %p127 = scmp.eq.s32.totalorder %s27, 3
      %p128 = por %p126, %p127
      %p130 = scmp.ne.s32.totalorder %s113, %s129
      %p131 = scmp.eq.s32.totalorder %s27, 0
      %p132 = por %p130, %p131
      %s133 = ssub.s32 %s21, %s28
      %p134 = scmp.eq.s32.totalorder %s133, 0
      %s136 = sadd.s32 %s135, 1
      %s137 = scalar_select %p134, %s135, %s136
      %p140 = pneg %p134
      %p141 = scmp.eq.s32.totalorder %s21, 3
      %p142 = por %p140, %p141
      %p143 = scmp.ne.s32.totalorder %s135, %s138
      %p144 = scmp.eq.s32.totalorder %s21, 0
      %p145 = por %p143, %p144
      %p146 = scmp.ne.s32.totalorder %s135, %s138
      %p147 = scmp.eq.s32.totalorder %s26, 3
      %p148 = por %p146, %p147
      %p149 = scmp.ne.s32.totalorder %s138, %s139
      %p150 = scmp.eq.s32.totalorder %s26, 0
      %p151 = por %p149, %p150
      %p152 = scmp.ne.s32.totalorder %s138, %s139
      %p153 = scmp.eq.s32.totalorder %s27, 3
      %p154 = por %p152, %p153
      %p156 = scmp.ne.s32.totalorder %s139, %s155
      %p157 = scmp.eq.s32.totalorder %s27, 0
      %p158 = por %p156, %p157
      %s160 = sadd.s32 %s159, 1
      %p163 = scmp.eq.s32.totalorder %s21, 3
      %p164 = scmp.ne.s32.totalorder %s159, %s161
      %p165 = scmp.eq.s32.totalorder %s21, 0
      %p166 = por %p164, %p165
      %p167 = scmp.ne.s32.totalorder %s159, %s161
      %p168 = scmp.eq.s32.totalorder %s26, 3
      %p169 = por %p167, %p168
      %p170 = scmp.ne.s32.totalorder %s161, %s162
      %p171 = scmp.eq.s32.totalorder %s26, 0
      %p172 = por %p170, %p171
      %p173 = scmp.ne.s32.totalorder %s161, %s162
      %p174 = scmp.eq.s32.totalorder %s27, 3
      %p175 = por %p173, %p174
      %p177 = scmp.ne.s32.totalorder %s162, %s176
      %p178 = scmp.eq.s32.totalorder %s27, 0
      %p179 = por %p177, %p178
      %s181 = sadd.s32 %s180, 1
      %p184 = scmp.eq.s32.totalorder %s21, 3
      %p185 = scmp.ne.s32.totalorder %s180, %s182
      %p186 = scmp.eq.s32.totalorder %s21, 0
      %p187 = por %p185, %p186
      %p188 = scmp.ne.s32.totalorder %s180, %s182
      %p189 = scmp.eq.s32.totalorder %s26, 3
      %p190 = por %p188, %p189
      %p191 = scmp.ne.s32.totalorder %s182, %s183
      %p192 = scmp.eq.s32.totalorder %s26, 0
      %p193 = por %p191, %p192
      %p194 = scmp.ne.s32.totalorder %s182, %s183
      %p195 = scmp.eq.s32.totalorder %s27, 3
      %p196 = por %p194, %p195
      %p198 = scmp.ne.s32.totalorder %s183, %s197
      %p199 = scmp.eq.s32.totalorder %s27, 0
      %p200 = por %p198, %p199
      %s202 = sadd.s32 %s201, 1
      %p205 = scmp.eq.s32.totalorder %s21, 3
      %p206 = scmp.ne.s32.totalorder %s201, %s203
      %p207 = scmp.eq.s32.totalorder %s21, 0
      %p208 = por %p206, %p207
      %p209 = scmp.ne.s32.totalorder %s201, %s203
      %p210 = scmp.eq.s32.totalorder %s26, 3
      %p211 = por %p209, %p210
      %p212 = scmp.ne.s32.totalorder %s203, %s204
      %p213 = scmp.eq.s32.totalorder %s26, 0
      %p214 = por %p212, %p213
      %p215 = scmp.ne.s32.totalorder %s203, %s204
      %p216 = scmp.eq.s32.totalorder %s27, 3
      %p217 = por %p215, %p216
      %p219 = scmp.ne.s32.totalorder %s204, %s218
      %p220 = scmp.eq.s32.totalorder %s27, 0
      %p221 = por %p219, %p220
      %s223 = sadd.s32 %s222, 1
      %p226 = scmp.eq.s32.totalorder %s21, 3
      %p227 = scmp.ne.s32.totalorder %s222, %s224
      %p228 = scmp.eq.s32.totalorder %s21, 0
      %p229 = por %p227, %p228
      %p230 = scmp.ne.s32.totalorder %s222, %s224
      %p231 = scmp.eq.s32.totalorder %s26, 3
      %p232 = por %p230, %p231
      %p233 = scmp.ne.s32.totalorder %s224, %s225
      %p234 = scmp.eq.s32.totalorder %s26, 0
      %p235 = por %p233, %p234
      %p236 = scmp.ne.s32.totalorder %s224, %s225
      %p237 = scmp.eq.s32.totalorder %s27, 3
      %p238 = por %p236, %p237
      %p240 = scmp.ne.s32.totalorder %s225, %s239
      %p241 = scmp.eq.s32.totalorder %s27, 0
      %p242 = por %p240, %p241
      %s243 = ssub.s32 %s21, %s28
      %p244 = scmp.eq.s32.totalorder %s243, 0
      %s246 = sadd.s32 %s245, 1
      %s247 = scalar_select %p244, %s245, %s246
      %p250 = pneg %p244
      %p251 = scmp.eq.s32.totalorder %s21, 3
      %p252 = por %p250, %p251
      %p253 = scmp.ne.s32.totalorder %s245, %s248
      %p254 = scmp.eq.s32.totalorder %s21, 0
      %p255 = por %p253, %p254
      %p256 = scmp.ne.s32.totalorder %s245, %s248
      %p257 = scmp.eq.s32.totalorder %s26, 3
      %p258 = por %p256, %p257
      %p259 = scmp.ne.s32.totalorder %s248, %s249
      %p260 = scmp.eq.s32.totalorder %s26, 0
      %p261 = por %p259, %p260
      %p262 = scmp.ne.s32.totalorder %s248, %s249
      %p263 = scmp.eq.s32.totalorder %s27, 3
      %p264 = por %p262, %p263
      %p266 = scmp.ne.s32.totalorder %s249, %s265
      %p267 = scmp.eq.s32.totalorder %s27, 0
      %p268 = por %p266, %p267
      %p269 = scmp.le.s32.totalorder 1, %s21
      %p270 = scmp.lt.s32.totalorder %s21, 5
      %p271 = pnand %p269, %p270
      %p272 = pneg %p271
      // Predicated region
      $region9: #{tpu_custom_call.1} parent=5 // pred_check
        _
      $region10: #{tpu_custom_call.1} parent=5 // pred_check_branch
        %274 = sbr.rel (%p271) target = $region12
      $region11: #{tpu_custom_call.1} parent=5 // pred_region
        %s275 = ssub.s32 %s21, 1
        // Predicated region
        $region13: #{tpu_custom_call.1} parent=11 // pred_check
          %p276 = pneg %p172
        $region14: #{tpu_custom_call.1} parent=11 // pred_check_branch
          %278 = sbr.rel (%p276) target = $region16
        $region15: #{tpu_custom_call.1} parent=11 // pred_region
          _
        $region16: #{tpu_custom_call.1} parent=11 // pred_fallthru
          _
        // Predicated region
        $region17: #{tpu_custom_call.1} parent=11 // pred_check
          %p279 = pneg %p193
        $region18: #{tpu_custom_call.1} parent=11 // pred_check_branch
          %281 = sbr.rel (%p279) target = $region20
        $region19: #{tpu_custom_call.1} parent=11 // pred_region
          _
        $region20: #{tpu_custom_call.1} parent=11 // pred_fallthru
          _
        // Predicated region
        $region21: #{tpu_custom_call.1} parent=11 // pred_check
          %p282 = pneg %p214
        $region22: #{tpu_custom_call.1} parent=11 // pred_check_branch
          %284 = sbr.rel (%p282) target = $region24
        $region23: #{tpu_custom_call.1} parent=11 // pred_region
          _
        $region24: #{tpu_custom_call.1} parent=11 // pred_fallthru
          _
        // Predicated region
        $region25: #{tpu_custom_call.1} parent=11 // pred_check
          %p285 = pneg %p235
        $region26: #{tpu_custom_call.1} parent=11 // pred_check_branch
          %287 = sbr.rel (%p285) target = $region28
        $region27: #{tpu_custom_call.1} parent=11 // pred_region
          _
        $region28: #{tpu_custom_call.1} parent=11 // pred_fallthru
          _
      $region12: #{tpu_custom_call.1} parent=5 // pred_fallthru
        _
      %p288 = scmp.lt.s32.totalorder %s21, 4
      // Predicated region
      $region29: #{tpu_custom_call.1} parent=5 // pred_check
        %p289 = pneg %p288
      $region30: #{tpu_custom_call.1} parent=5 // pred_check_branch
        %291 = sbr.rel (%p289) target = $region32
      $region31: #{tpu_custom_call.1} parent=5 // pred_region
        // Predicated region
        $region33: #{tpu_custom_call.1} parent=31 // pred_check
          %p292 = pneg %p41
        $region34: #{tpu_custom_call.1} parent=31 // pred_check_branch
          %294 = sbr.rel (%p292) target = $region36
        $region35: #{tpu_custom_call.1} parent=31 // pred_region
          %s295 = sand.u32 %s31, 1
          %s296 = scalar_lea.sflag [#allocation3], %s295
          %s297 = sand.u32 %s31, 1
          %s298 = smul.addr %s297, 32
          %s299 = scalar_lea.vmem [#allocation2], %s298
          %s300 = smul.u32 2, %s21
          %s302 = ssub.s32 512, 512
          %303 = vsyncadd %s296, %s302
          %s304 = smul.addr %s300, 2
          %s305 = smul.addr %s304, 128
          %s306 = scalar_lea.hbm %s0, %s305
          %s307 = sshll.u32 %s299, 4
          %s308 = int_to_ptr.vmem [resolvable:$true] %s307
          %313 = dma.hbm_to_vmem [thread:$0]  %s306, 512, %s308, %s296, 128, 128, 8
        $region36: #{tpu_custom_call.1} parent=31 // pred_fallthru
          _
        // Predicated region
        $region37: #{tpu_custom_call.1} parent=31 // pred_check
          %p314 = pneg %p67
        $region38: #{tpu_custom_call.1} parent=31 // pred_check_branch
          %316 = sbr.rel (%p314) target = $region40
        $region39: #{tpu_custom_call.1} parent=31 // pred_region
          %s317 = smul.u32 2, %s21
          %p318 = scmp.lt.s32.totalorder %s317, 7
          %s319 = scalar_select %p318, %s317, 7
          %s320 = smul.addr %s319, 4
          %s321 = scalar_lea.vmem %s1, %s320
          %s322 = smul.u32 2, %s21
        $region40: #{tpu_custom_call.1} parent=31 // pred_fallthru
          _
        // Predicated region
        $region41: #{tpu_custom_call.1} parent=31 // pred_check
          %p323 = pneg %p93
        $region42: #{tpu_custom_call.1} parent=31 // pred_check_branch
          %325 = sbr.rel (%p323) target = $region44
        $region43: #{tpu_custom_call.1} parent=31 // pred_region
          %s326 = smul.u32 2, %s21
          %p327 = scmp.lt.s32.totalorder %s326, 7
          %s328 = scalar_select %p327, %s326, 7
          %s329 = smul.addr %s328, 8
          %s330 = scalar_lea.vmem %s2, %s329
          %s331 = smul.u32 2, %s21
        $region44: #{tpu_custom_call.1} parent=31 // pred_fallthru
          _
        // Predicated region
        $region45: #{tpu_custom_call.1} parent=31 // pred_check
          %p332 = pneg %p119
        $region46: #{tpu_custom_call.1} parent=31 // pred_check_branch
          %334 = sbr.rel (%p332) target = $region48
        $region47: #{tpu_custom_call.1} parent=31 // pred_region
          %s335 = sand.u32 %s21, 1
          %s336 = scalar_lea.sflag [#allocation5], %s335
          %s337 = sand.u32 %s109, 1
          %s338 = smul.addr %s337, 32
          %s339 = scalar_lea.vmem [#allocation4], %s338
          %s340 = smul.u32 2, %s21
          %s342 = ssub.s32 512, 512
          %343 = vsyncadd %s336, %s342
          %s344 = smul.addr %s340, 2
          %s345 = smul.addr %s344, 128
          %s346 = scalar_lea.hbm %s3, %s345
          %s347 = sshll.u32 %s339, 4
          %s348 = int_to_ptr.vmem [resolvable:$true] %s347
          %353 = dma.hbm_to_vmem [thread:$0]  %s346, 512, %s348, %s336, 128, 128, 8
        $region48: #{tpu_custom_call.1} parent=31 // pred_fallthru
          _
        // Predicated region
        $region49: #{tpu_custom_call.1} parent=31 // pred_check
          %p354 = pneg %p145
        $region50: #{tpu_custom_call.1} parent=31 // pred_check_branch
          %356 = sbr.rel (%p354) target = $region52
        $region51: #{tpu_custom_call.1} parent=31 // pred_region
          %s357 = sand.u32 %s21, 1
          %s358 = scalar_lea.sflag [#allocation5], %s357
          %s359 = sand.u32 %s135, 1
          %s360 = smul.addr %s359, 32
          %s361 = scalar_lea.vmem [#allocation6], %s360
          %s362 = smul.u32 2, %s21
          %s364 = ssub.s32 512, 512
          %365 = vsyncadd %s358, %s364
          %s366 = smul.addr %s362, 2
          %s367 = smul.addr %s366, 128
          %s368 = scalar_lea.hbm %s4, %s367
          %s369 = sshll.u32 %s361, 4
          %s370 = int_to_ptr.vmem [resolvable:$true] %s369
          %375 = dma.hbm_to_vmem [thread:$0]  %s368, 512, %s370, %s358, 128, 128, 8
        $region52: #{tpu_custom_call.1} parent=31 // pred_fallthru
          _
      $region32: #{tpu_custom_call.1} parent=5 // pred_fallthru
        _
      %p376 = scmp.le.s32.totalorder 1, %s21
      %p377 = scmp.lt.s32.totalorder %s21, 5
      %p378 = pnand %p376, %p377
      %p379 = pneg %p378
      // Predicated region
      $region53: #{tpu_custom_call.1} parent=5 // pred_check
        _
      $region54: #{tpu_custom_call.1} parent=5 // pred_check_branch
        %381 = sbr.rel (%p378) target = $region56
      $region55: #{tpu_custom_call.1} parent=5 // pred_region
        %s382 = ssub.s32 %s21, 1
        %s383 = sand.u32 %s34, 1
        %s384 = scalar_lea.sflag [#allocation3], %s383
        %s385 = sand.u32 %s34, 1
        %s386 = smul.addr %s385, 32
        %s387 = scalar_lea.vmem [#allocation2], %s386
        // Predicated region
        $region57: #{tpu_custom_call.1} parent=55 // pred_check
          %p388 = pneg %p47
        $region58: #{tpu_custom_call.1} parent=55 // pred_check_branch
          %390 = sbr.rel (%p388) target = $region60
        $region59: #{tpu_custom_call.1} parent=55 // pred_region
          %391 = dma.done %s384, 512
        $region60: #{tpu_custom_call.1} parent=55 // pred_fallthru
          _
        %s392 = sand.u32 %s26, 1
        %s393 = scalar_lea.sflag [#allocation5], %s392
        %s394 = sand.u32 %s112, 1
        %s395 = smul.addr %s394, 32
        %s396 = scalar_lea.vmem [#allocation4], %s395
        // Predicated region
        $region61: #{tpu_custom_call.1} parent=55 // pred_check
          %p397 = pneg %p125
        $region62: #{tpu_custom_call.1} parent=55 // pred_check_branch
          %399 = sbr.rel (%p397) target = $region64
        $region63: #{tpu_custom_call.1} parent=55 // pred_region
          %400 = dma.done %s393, 512
        $region64: #{tpu_custom_call.1} parent=55 // pred_fallthru
          _
        %s401 = sand.u32 %s26, 1
        %s402 = scalar_lea.sflag [#allocation5], %s401
        %s403 = sand.u32 %s138, 1
        %s404 = smul.addr %s403, 32
        %s405 = scalar_lea.vmem [#allocation6], %s404
        // Predicated region
        $region65: #{tpu_custom_call.1} parent=55 // pred_check
          %p406 = pneg %p151
        $region66: #{tpu_custom_call.1} parent=55 // pred_check_branch
          %408 = sbr.rel (%p406) target = $region68
        $region67: #{tpu_custom_call.1} parent=55 // pred_region
          %409 = dma.done %s402, 512
        $region68: #{tpu_custom_call.1} parent=55 // pred_fallthru
          _
        %s410 = sand.u32 %s34, 1
        %s411 = scalar_lea.sflag [#allocation3], %s410
        %s412 = sand.u32 %s34, 1
        %s413 = smul.addr %s412, 32
        %s414 = scalar_lea.vmem [#allocation2], %s413
        %p415 = pneg %p47
        %p416 = pneg %p44
        %s417 = smul.u32 2, %s26
        %p418 = scmp.lt.s32.totalorder %s417, 7
        %s419 = scalar_select %p418, %s417, 7
        %s420 = smul.addr %s419, 4
        %s421 = scalar_lea.vmem %s1, %s420
        %p422 = pneg %p73
        %p423 = pneg %p70
        %s424 = smul.u32 2, %s26
        %p425 = scmp.lt.s32.totalorder %s424, 7
        %s426 = scalar_select %p425, %s424, 7
        %s427 = smul.addr %s426, 8
        %s428 = scalar_lea.vmem %s2, %s427
        %p429 = pneg %p99
        %p430 = pneg %p96
        %s431 = sand.u32 %s26, 1
        %s432 = scalar_lea.sflag [#allocation5], %s431
        %s433 = sand.u32 %s112, 1
        %s434 = smul.addr %s433, 32
        %s435 = scalar_lea.vmem [#allocation4], %s434
        %p436 = pneg %p125
        %p437 = pneg %p122
        %s438 = sand.u32 %s26, 1
        %s439 = scalar_lea.sflag [#allocation5], %s438
        %s440 = sand.u32 %s138, 1
        %s441 = smul.addr %s440, 32
        %s442 = scalar_lea.vmem [#allocation6], %s441
        %p443 = pneg %p151
        %p444 = pneg %p148
        %p445 = pneg %p172
        %p446 = pneg %p169
        %p447 = pneg %p193
        %p448 = pneg %p190
        %p449 = pneg %p214
        %p450 = pneg %p211
        %p451 = pneg %p235
        %p452 = pneg %p232
        %p453 = pneg %p261
        %p454 = pneg %p258
        %p455 = scmp.lt.s32.totalorder %s26, 3
        %s456 = scalar_select %p455, %s26, 3
        %s457 = scalar_lea.vmem %s9, %s456
        %s458 = smul.u32 2, %s26
        %s459 = smul.u32 2, %s26
        %p460 = scmp.lt.s32.totalorder %s459, 7
        %s461 = scalar_select %p460, %s459, 7
        %s462 = smul.addr %s461, 4
        %s463 = scalar_lea.vmem %s1, %s462
        %s464 = smul.u32 2, %s26
        %s465 = smul.u32 2, %s26
        %p466 = scmp.lt.s32.totalorder %s465, 7
        %s467 = scalar_select %p466, %s465, 7
        %s468 = smul.addr %s467, 8
        %s469 = scalar_lea.vmem %s2, %s468
        %s470 = smul.u32 2, %s26
        %s471 = smul.u32 2, %s26
        %s472 = smul.u32 2, %s26
        %p473 = scmp.lt.s32.totalorder %s26, 3
        %s474 = scalar_select %p473, %s26, 3
        %s475 = scalar_lea.vmem %s9, %s474
        %v476 = vld [vmem:[%s387] sm:$0xff]
        %v477 = vld [vmem:[%s387 + $0x8] sm:$0xff]
        %v478 = vld [vmem:[%s387 + $0x10] sm:$0xff]
        %v479 = vld [vmem:[%s387 + $0x18] sm:$0xff]
        %v480 = vld [vmem:[%s463] sm:$0xf]
        %v481 = vld [vmem:[%s463 + $0x4] sm:$0xf]
        %v482 = vld [vmem:[%s5] sm:$0xf]
        %v483 = vld [vmem:[%s6] sm:$0xff]
        %v484 = vld [vmem:[%s6 + $0x8] sm:$0xff]
        %vm485 = vcmask 130048
        %v487 = vsel %vm485, %v476, 0
        %v490 = vsel %vm485, %v477, 0
        %v493 = vsel %vm485, %v478, 0
        %v496 = vsel %vm485, %v479, 0
        %498 = vmatprep.subr.mxu0 0.0
        %499 = vmatpush1.msra.mxu0 0.0
        %500 = vmatprep.subr.mxu0 0.0
        %501 = vmatpush1.msra.mxu0 0.0
        %502 = vmatprep.subr.mxu0 0.0
        %503 = vmatpush1.msra.mxu0 0.0
        %504 = vmatprep.subr.mxu0 0.0
        %505 = vmatpush1.msra.mxu0 0.0
        %506 = vmatprep.subr.mxu0 0.0
        %507 = vmatpush1.msra.mxu0 0.0
        %508 = vmatprep.subr.mxu0 0.0
        %509 = vmatpush1.msra.mxu0 0.0
        %510 = vmatprep.subr.mxu0 0.0
        %511 = vmatpush1.msra.mxu0 0.0
        %512 = vmatprep.subr.mxu0 0.0
        %513 = vmatpush1.msra.mxu0 0.0
        %514 = vmatprep.subr.mxu0 0.0
        %515 = vmatpush1.msra.mxu0 0.0
        %516 = vmatprep.subr.mxu0 0.0
        %517 = vmatpush1.msra.mxu0 0.0
        %518 = vmatprep.subr.mxu0 0.0
        %519 = vmatpush1.msra.mxu0 0.0
        %520 = vmatprep.subr.mxu0 0.0
        %521 = vmatpush1.msra.mxu0 0.0
        %522 = vmatprep.subr.mxu0 0.0
        %523 = vmatpush1.msra.mxu0 0.0
        %524 = vmatprep.subr.mxu0 0.0
        %525 = vmatpush1.msra.mxu0 0.0
        %526 = vmatprep.subr.mxu0 0.0
        %527 = vmatpush1.msra.mxu0 %v484
        %528 = vmatprep.subr.mxu0 0.0
        %529 = vmatpush1.msra.mxu0 %v483
        %530 = vmatprep.subr.mxu0 0.0
        %531 = vmatpush2.msra.mxu0 0.0
        %532 = vmatprep.subr.mxu0 0.0
        %533 = vmatpush2.msra.mxu0 0.0
        %534 = vmatprep.subr.mxu0 0.0
        %535 = vmatpush2.msra.mxu0 0.0
        %536 = vmatprep.subr.mxu0 0.0
        %537 = vmatpush2.msra.mxu0 0.0
        %538 = vmatprep.subr.mxu0 0.0
        %539 = vmatpush2.msra.mxu0 0.0
        %540 = vmatprep.subr.mxu0 0.0
        %541 = vmatpush2.msra.mxu0 0.0
        %542 = vmatprep.subr.mxu0 0.0
        %543 = vmatpush2.msra.mxu0 0.0
        %544 = vmatprep.subr.mxu0 0.0
        %545 = vmatpush2.msra.mxu0 0.0
        %546 = vmatprep.subr.mxu0 0.0
        %547 = vmatpush2.msra.mxu0 0.0
        %548 = vmatprep.subr.mxu0 0.0
        %549 = vmatpush2.msra.mxu0 0.0
        %550 = vmatprep.subr.mxu0 0.0
        %551 = vmatpush2.msra.mxu0 0.0
        %552 = vmatprep.subr.mxu0 0.0
        %553 = vmatpush2.msra.mxu0 0.0
        %554 = vmatprep.subr.mxu0 0.0
        %555 = vmatpush2.msra.mxu0 0.0
        %556 = vmatprep.subr.mxu0 0.0
        %557 = vmatpush2.msra.mxu0 0.0
        %558 = vmatprep.subr.mxu0 0.0
        %559 = vmatpush2.msra.mxu0 0.0
        %560 = vmatprep.subr.mxu0 0.0
        %561 = vmatpush2.msra.mxu0 0.0
        %562 = vmatprep.mubr.f32.mxu0 0.0
        %563 = vmatmul.mubr.f32.gmra.mxu0 %v487
        %v564 = vpop.f32.mrf.mxu0
        %v565 = vadd.f32 0.0, %v564
        %v566 = vpop.f32.mrf.mxu0
        %567 = vmatprep.mubr.f32.mxu0 0.0
        %568 = vmatmul.mubr.f32.gmra.mxu0 %v490
        %v569 = vpop.f32.mrf.mxu0
        %v570 = vadd.f32 0.0, %v569
        %v571 = vpop.f32.mrf.mxu0
        %572 = vmatprep.mubr.f32.mxu0 0.0
        %573 = vmatmul.mubr.f32.gmra.mxu0 %v493
        %v574 = vpop.f32.mrf.mxu0
        %v575 = vadd.f32 0.0, %v574
        %v576 = vpop.f32.mrf.mxu0
        %577 = vmatprep.mubr.f32.mxu0 0.0
        %578 = vmatmul.mubr.f32.gmra.mxu0 %v496
        %v579 = vpop.f32.mrf.mxu0
        %v580 = vadd.f32 0.0, %v579
        %v581 = vpop.f32.mrf.mxu0
        %582 = vdwg.mxu0
        %v584 = vsel %vm485, %v482, 0
        %586 = vmatprep.subr.mxu0 0.0
        %587 = vmatpush1.msra.mxu0 0.0
        %588 = vmatprep.subr.mxu0 0.0
        %589 = vmatpush1.msra.mxu0 0.0
        %590 = vmatprep.subr.mxu0 0.0
        %591 = vmatpush1.msra.mxu0 0.0
        %592 = vmatprep.subr.mxu0 0.0
        %593 = vmatpush1.msra.mxu0 0.0
        %594 = vmatprep.subr.mxu0 0.0
        %595 = vmatpush1.msra.mxu0 0.0
        %596 = vmatprep.subr.mxu0 0.0
        %597 = vmatpush1.msra.mxu0 0.0
        %598 = vmatprep.subr.mxu0 0.0
        %599 = vmatpush1.msra.mxu0 0.0
        %600 = vmatprep.subr.mxu0 0.0
        %601 = vmatpush1.msra.mxu0 0.0
        %602 = vmatprep.subr.mxu0 0.0
        %603 = vmatpush1.msra.mxu0 0.0
        %604 = vmatprep.subr.mxu0 0.0
        %605 = vmatpush1.msra.mxu0 0.0
        %606 = vmatprep.subr.mxu0 0.0
        %607 = vmatpush1.msra.mxu0 0.0
        %608 = vmatprep.subr.mxu0 0.0
        %609 = vmatpush1.msra.mxu0 0.0
        %610 = vmatprep.subr.mxu0 0.0
        %611 = vmatpush1.msra.mxu0 0.0
        %612 = vmatprep.subr.mxu0 0.0
        %613 = vmatpush1.msra.mxu0 0.0
        %614 = vmatprep.subr.mxu0 0.0
        %615 = vmatpush1.msra.mxu0 %v570
        %616 = vmatprep.subr.mxu0 0.0
        %617 = vmatpush1.msra.mxu0 %v565
        %618 = vmatprep.subr.mxu0 0.0
        %619 = vmatpush2.msra.mxu0 0.0
        %620 = vmatprep.subr.mxu0 0.0
        %621 = vmatpush2.msra.mxu0 0.0
        %622 = vmatprep.subr.mxu0 0.0
        %623 = vmatpush2.msra.mxu0 0.0
        %624 = vmatprep.subr.mxu0 0.0
        %625 = vmatpush2.msra.mxu0 0.0
        %626 = vmatprep.subr.mxu0 0.0
        %627 = vmatpush2.msra.mxu0 0.0
        %628 = vmatprep.subr.mxu0 0.0
        %629 = vmatpush2.msra.mxu0 0.0
        %630 = vmatprep.subr.mxu0 0.0
        %631 = vmatpush2.msra.mxu0 0.0
        %632 = vmatprep.subr.mxu0 0.0
        %633 = vmatpush2.msra.mxu0 0.0
        %634 = vmatprep.subr.mxu0 0.0
        %635 = vmatpush2.msra.mxu0 0.0
        %636 = vmatprep.subr.mxu0 0.0
        %637 = vmatpush2.msra.mxu0 0.0
        %638 = vmatprep.subr.mxu0 0.0
        %639 = vmatpush2.msra.mxu0 0.0
        %640 = vmatprep.subr.mxu0 0.0
        %641 = vmatpush2.msra.mxu0 0.0
        %642 = vmatprep.subr.mxu0 0.0
        %643 = vmatpush2.msra.mxu0 0.0
        %644 = vmatprep.subr.mxu0 0.0
        %645 = vmatpush2.msra.mxu0 0.0
        %646 = vmatprep.subr.mxu0 0.0
        %647 = vmatpush2.msra.mxu0 0.0
        %648 = vmatprep.subr.mxu0 0.0
        %649 = vmatpush2.msra.mxu0 0.0
        %650 = vmatprep.mubr.f32.mxu0 0.0
        %651 = vmatmul.mubr.f32.gmra.mxu0 %v584
        %v652 = vpop.f32.mrf.mxu0
        %v653 = vadd.f32 0.0, %v652
        %v654 = vpop.f32.mrf.mxu0
        %655 = vdwg.mxu0
        %656 = vmatprep.subr.mxu0 0.0
        %657 = vmatpush1.msra.mxu0 0.0
        %658 = vmatprep.subr.mxu0 0.0
        %659 = vmatpush1.msra.mxu0 0.0
        %660 = vmatprep.subr.mxu0 0.0
        %661 = vmatpush1.msra.mxu0 0.0
        %662 = vmatprep.subr.mxu0 0.0
        %663 = vmatpush1.msra.mxu0 0.0
        %664 = vmatprep.subr.mxu0 0.0
        %665 = vmatpush1.msra.mxu0 0.0
        %666 = vmatprep.subr.mxu0 0.0
        %667 = vmatpush1.msra.mxu0 0.0
        %668 = vmatprep.subr.mxu0 0.0
        %669 = vmatpush1.msra.mxu0 0.0
        %670 = vmatprep.subr.mxu0 0.0
        %671 = vmatpush1.msra.mxu0 0.0
        %672 = vmatprep.subr.mxu0 0.0
        %673 = vmatpush1.msra.mxu0 0.0
        %674 = vmatprep.subr.mxu0 0.0
        %675 = vmatpush1.msra.mxu0 0.0
        %676 = vmatprep.subr.mxu0 0.0
        %677 = vmatpush1.msra.mxu0 0.0
        %678 = vmatprep.subr.mxu0 0.0
        %679 = vmatpush1.msra.mxu0 0.0
        %680 = vmatprep.subr.mxu0 0.0
        %681 = vmatpush1.msra.mxu0 0.0
        %682 = vmatprep.subr.mxu0 0.0
        %683 = vmatpush1.msra.mxu0 0.0
        %684 = vmatprep.subr.mxu0 0.0
        %685 = vmatpush1.msra.mxu0 %v580
        %686 = vmatprep.subr.mxu0 0.0
        %687 = vmatpush1.msra.mxu0 %v575
        %688 = vmatprep.subr.mxu0 0.0
        %689 = vmatpush2.msra.mxu0 0.0
        %690 = vmatprep.subr.mxu0 0.0
        %691 = vmatpush2.msra.mxu0 0.0
        %692 = vmatprep.subr.mxu0 0.0
        %693 = vmatpush2.msra.mxu0 0.0
        %694 = vmatprep.subr.mxu0 0.0
        %695 = vmatpush2.msra.mxu0 0.0
        %696 = vmatprep.subr.mxu0 0.0
        %697 = vmatpush2.msra.mxu0 0.0
        %698 = vmatprep.subr.mxu0 0.0
        %699 = vmatpush2.msra.mxu0 0.0
        %700 = vmatprep.subr.mxu0 0.0
        %701 = vmatpush2.msra.mxu0 0.0
        %702 = vmatprep.subr.mxu0 0.0
        %703 = vmatpush2.msra.mxu0 0.0
        %704 = vmatprep.subr.mxu0 0.0
        %705 = vmatpush2.msra.mxu0 0.0
        %706 = vmatprep.subr.mxu0 0.0
        %707 = vmatpush2.msra.mxu0 0.0
        %708 = vmatprep.subr.mxu0 0.0
        %709 = vmatpush2.msra.mxu0 0.0
        %710 = vmatprep.subr.mxu0 0.0
        %711 = vmatpush2.msra.mxu0 0.0
        %712 = vmatprep.subr.mxu0 0.0
        %713 = vmatpush2.msra.mxu0 0.0
        %714 = vmatprep.subr.mxu0 0.0
        %715 = vmatpush2.msra.mxu0 0.0
        %716 = vmatprep.subr.mxu0 0.0
        %717 = vmatpush2.msra.mxu0 0.0
        %718 = vmatprep.subr.mxu0 0.0
        %719 = vmatpush2.msra.mxu0 0.0
        %720 = vmatprep.mubr.f32.mxu0 0.0
        %721 = vmatmul.mubr.f32.gmra.mxu0 %v584
        %v722 = vpop.f32.mrf.mxu0
        %v723 = vadd.f32 0.0, %v722
        %v724 = vpop.f32.mrf.mxu0
        %725 = vdwg.mxu0
        %v726 = vsub.f32 %v480, %v653
        %v727 = vsub.f32 %v481, %v723
        %v728 = vand.u32 2147483647, %v726
        %v729 = vand.u32 2147483647, %v727
        %vm730 = vcmp.lt.f32.partialorder %v728, 1.0
        %vm731 = vcmp.lt.f32.partialorder %v729, 1.0
        %v732 = vmul.f32 %v726, 0.5
        %v733 = vmul.f32 %v727, 0.5
        %v734 = vmul.f32 %v732, %v726
        %v735 = vmul.f32 %v733, %v727
        %v736 = vsub.f32 %v728, 0.5
        %v737 = vsub.f32 %v729, 0.5
        %v738 = vsel %vm730, %v734, %v736
        %v739 = vsel %vm731, %v735, %v737
        %vm740 = vcmask 27648
        %v741 = vsel %vm740, %v738, 0.0
        %v742 = vsel %vm740, %v739, 0.0
        %v743 = vadd.f32 %v741, %v742
        %744 = vadd.xlane.f32.xlu0 %v743
        %v745 = vpop.xlane.xlu0 %744
        %v746 = vrot.slane %v745, 4
        %v747 = vadd.f32 %v745, %v746
        %v748 = vrot.slane %v747, 2
        %v749 = vadd.f32 %v747, %v748
        %v750 = vrot.slane %v749, 1
        %v751 = vadd.f32 %v749, %v750
        %s752 = vtos %v751
        %s753 = smul.f32 %s752, 0.0046875
        %v754 = vstv %s753
        %v755 = vadd.f32 %v754, 0.0
        %v756 = vld [vmem:[%s469] sm:$0xff]
        %v757 = vld [vmem:[%s469 + $0x8] sm:$0xff]
        %v758 = vld [vmem:[%s7] sm:$0xff]
        %v759 = vld [vmem:[%s8] sm:$0xff]
        %v760 = vld [vmem:[%s8 + $0x8] sm:$0xff]
        %761 = vmatprep.subr.mxu0 0.0
        %762 = vmatpush1.msra.mxu0 0.0
        %763 = vmatprep.subr.mxu0 0.0
        %764 = vmatpush1.msra.mxu0 0.0
        %765 = vmatprep.subr.mxu0 0.0
        %766 = vmatpush1.msra.mxu0 0.0
        %767 = vmatprep.subr.mxu0 0.0
        %768 = vmatpush1.msra.mxu0 0.0
        %769 = vmatprep.subr.mxu0 0.0
        %770 = vmatpush1.msra.mxu0 0.0
        %771 = vmatprep.subr.mxu0 0.0
        %772 = vmatpush1.msra.mxu0 0.0
        %773 = vmatprep.subr.mxu0 0.0
        %774 = vmatpush1.msra.mxu0 0.0
        %775 = vmatprep.subr.mxu0 0.0
        %776 = vmatpush1.msra.mxu0 0.0
        %777 = vmatprep.subr.mxu0 0.0
        %778 = vmatpush1.msra.mxu0 0.0
        %779 = vmatprep.subr.mxu0 0.0
        %780 = vmatpush1.msra.mxu0 0.0
        %781 = vmatprep.subr.mxu0 0.0
        %782 = vmatpush1.msra.mxu0 0.0
        %783 = vmatprep.subr.mxu0 0.0
        %784 = vmatpush1.msra.mxu0 0.0
        %785 = vmatprep.subr.mxu0 0.0
        %786 = vmatpush1.msra.mxu0 0.0
        %787 = vmatprep.subr.mxu0 0.0
        %788 = vmatpush1.msra.mxu0 0.0
        %789 = vmatprep.subr.mxu0 0.0
        %790 = vmatpush1.msra.mxu0 %v760
        %791 = vmatprep.subr.mxu0 0.0
        %792 = vmatpush1.msra.mxu0 %v759
        %793 = vmatprep.subr.mxu0 0.0
        %794 = vmatpush2.msra.mxu0 0.0
        %795 = vmatprep.subr.mxu0 0.0
        %796 = vmatpush2.msra.mxu0 0.0
        %797 = vmatprep.subr.mxu0 0.0
        %798 = vmatpush2.msra.mxu0 0.0
        %799 = vmatprep.subr.mxu0 0.0
        %800 = vmatpush2.msra.mxu0 0.0
        %801 = vmatprep.subr.mxu0 0.0
        %802 = vmatpush2.msra.mxu0 0.0
        %803 = vmatprep.subr.mxu0 0.0
        %804 = vmatpush2.msra.mxu0 0.0
        %805 = vmatprep.subr.mxu0 0.0
        %806 = vmatpush2.msra.mxu0 0.0
        %807 = vmatprep.subr.mxu0 0.0
        %808 = vmatpush2.msra.mxu0 0.0
        %809 = vmatprep.subr.mxu0 0.0
        %810 = vmatpush2.msra.mxu0 0.0
        %811 = vmatprep.subr.mxu0 0.0
        %812 = vmatpush2.msra.mxu0 0.0
        %813 = vmatprep.subr.mxu0 0.0
        %814 = vmatpush2.msra.mxu0 0.0
        %815 = vmatprep.subr.mxu0 0.0
        %816 = vmatpush2.msra.mxu0 0.0
        %817 = vmatprep.subr.mxu0 0.0
        %818 = vmatpush2.msra.mxu0 0.0
        %819 = vmatprep.subr.mxu0 0.0
        %820 = vmatpush2.msra.mxu0 0.0
        %821 = vmatprep.subr.mxu0 0.0
        %822 = vmatpush2.msra.mxu0 0.0
        %823 = vmatprep.subr.mxu0 0.0
        %824 = vmatpush2.msra.mxu0 0.0
        %825 = vmatprep.mubr.f32.mxu0 0.0
        %826 = vmatmul.mubr.f32.gmra.mxu0 %v487
        %v827 = vpop.f32.mrf.mxu0
        %v828 = vadd.f32 0.0, %v827
        %v829 = vpop.f32.mrf.mxu0
        %830 = vmatprep.mubr.f32.mxu0 0.0
        %831 = vmatmul.mubr.f32.gmra.mxu0 %v490
        %v832 = vpop.f32.mrf.mxu0
        %v833 = vadd.f32 0.0, %v832
        %v834 = vpop.f32.mrf.mxu0
        %835 = vmatprep.mubr.f32.mxu0 0.0
        %836 = vmatmul.mubr.f32.gmra.mxu0 %v493
        %v837 = vpop.f32.mrf.mxu0
        %v838 = vadd.f32 0.0, %v837
        %v839 = vpop.f32.mrf.mxu0
        %840 = vmatprep.mubr.f32.mxu0 0.0
        %841 = vmatmul.mubr.f32.gmra.mxu0 %v496
        %v842 = vpop.f32.mrf.mxu0
        %v843 = vadd.f32 0.0, %v842
        %v844 = vpop.f32.mrf.mxu0
        %845 = vdwg.mxu0
        %v847 = vsel %vm485, %v758, 0
        %849 = vmatprep.subr.mxu0 0.0
        %850 = vmatpush1.msra.mxu0 0.0
        %851 = vmatprep.subr.mxu0 0.0
        %852 = vmatpush1.msra.mxu0 0.0
        %853 = vmatprep.subr.mxu0 0.0
        %854 = vmatpush1.msra.mxu0 0.0
        %855 = vmatprep.subr.mxu0 0.0
        %856 = vmatpush1.msra.mxu0 0.0
        %857 = vmatprep.subr.mxu0 0.0
        %858 = vmatpush1.msra.mxu0 0.0
        %859 = vmatprep.subr.mxu0 0.0
        %860 = vmatpush1.msra.mxu0 0.0
        %861 = vmatprep.subr.mxu0 0.0
        %862 = vmatpush1.msra.mxu0 0.0
        %863 = vmatprep.subr.mxu0 0.0
        %864 = vmatpush1.msra.mxu0 0.0
        %865 = vmatprep.subr.mxu0 0.0
        %866 = vmatpush1.msra.mxu0 0.0
        %867 = vmatprep.subr.mxu0 0.0
        %868 = vmatpush1.msra.mxu0 0.0
        %869 = vmatprep.subr.mxu0 0.0
        %870 = vmatpush1.msra.mxu0 0.0
        %871 = vmatprep.subr.mxu0 0.0
        %872 = vmatpush1.msra.mxu0 0.0
        %873 = vmatprep.subr.mxu0 0.0
        %874 = vmatpush1.msra.mxu0 0.0
        %875 = vmatprep.subr.mxu0 0.0
        %876 = vmatpush1.msra.mxu0 0.0
        %877 = vmatprep.subr.mxu0 0.0
        %878 = vmatpush1.msra.mxu0 %v833
        %879 = vmatprep.subr.mxu0 0.0
        %880 = vmatpush1.msra.mxu0 %v828
        %881 = vmatprep.subr.mxu0 0.0
        %882 = vmatpush2.msra.mxu0 0.0
        %883 = vmatprep.subr.mxu0 0.0
        %884 = vmatpush2.msra.mxu0 0.0
        %885 = vmatprep.subr.mxu0 0.0
        %886 = vmatpush2.msra.mxu0 0.0
        %887 = vmatprep.subr.mxu0 0.0
        %888 = vmatpush2.msra.mxu0 0.0
        %889 = vmatprep.subr.mxu0 0.0
        %890 = vmatpush2.msra.mxu0 0.0
        %891 = vmatprep.subr.mxu0 0.0
        %892 = vmatpush2.msra.mxu0 0.0
        %893 = vmatprep.subr.mxu0 0.0
        %894 = vmatpush2.msra.mxu0 0.0
        %895 = vmatprep.subr.mxu0 0.0
        %896 = vmatpush2.msra.mxu0 0.0
        %897 = vmatprep.subr.mxu0 0.0
        %898 = vmatpush2.msra.mxu0 0.0
        %899 = vmatprep.subr.mxu0 0.0
        %900 = vmatpush2.msra.mxu0 0.0
        %901 = vmatprep.subr.mxu0 0.0
        %902 = vmatpush2.msra.mxu0 0.0
        %903 = vmatprep.subr.mxu0 0.0
        %904 = vmatpush2.msra.mxu0 0.0
        %905 = vmatprep.subr.mxu0 0.0
        %906 = vmatpush2.msra.mxu0 0.0
        %907 = vmatprep.subr.mxu0 0.0
        %908 = vmatpush2.msra.mxu0 0.0
        %909 = vmatprep.subr.mxu0 0.0
        %910 = vmatpush2.msra.mxu0 0.0
        %911 = vmatprep.subr.mxu0 0.0
        %912 = vmatpush2.msra.mxu0 0.0
        %913 = vmatprep.mubr.f32.mxu0 0.0
        %914 = vmatmul.mubr.f32.gmra.mxu0 %v847
        %v915 = vpop.f32.mrf.mxu0
        %v916 = vadd.f32 0.0, %v915
        %v917 = vpop.f32.mrf.mxu0
        %918 = vdwg.mxu0
        %919 = vmatprep.subr.mxu0 0.0
        %920 = vmatpush1.msra.mxu0 0.0
        %921 = vmatprep.subr.mxu0 0.0
        %922 = vmatpush1.msra.mxu0 0.0
        %923 = vmatprep.subr.mxu0 0.0
        %924 = vmatpush1.msra.mxu0 0.0
        %925 = vmatprep.subr.mxu0 0.0
        %926 = vmatpush1.msra.mxu0 0.0
        %927 = vmatprep.subr.mxu0 0.0
        %928 = vmatpush1.msra.mxu0 0.0
        %929 = vmatprep.subr.mxu0 0.0
        %930 = vmatpush1.msra.mxu0 0.0
        %931 = vmatprep.subr.mxu0 0.0
        %932 = vmatpush1.msra.mxu0 0.0
        %933 = vmatprep.subr.mxu0 0.0
        %934 = vmatpush1.msra.mxu0 0.0
        %935 = vmatprep.subr.mxu0 0.0
        %936 = vmatpush1.msra.mxu0 0.0
        %937 = vmatprep.subr.mxu0 0.0
        %938 = vmatpush1.msra.mxu0 0.0
        %939 = vmatprep.subr.mxu0 0.0
        %940 = vmatpush1.msra.mxu0 0.0
        %941 = vmatprep.subr.mxu0 0.0
        %942 = vmatpush1.msra.mxu0 0.0
        %943 = vmatprep.subr.mxu0 0.0
        %944 = vmatpush1.msra.mxu0 0.0
        %945 = vmatprep.subr.mxu0 0.0
        %946 = vmatpush1.msra.mxu0 0.0
        %947 = vmatprep.subr.mxu0 0.0
        %948 = vmatpush1.msra.mxu0 %v843
        %949 = vmatprep.subr.mxu0 0.0
        %950 = vmatpush1.msra.mxu0 %v838
        %951 = vmatprep.subr.mxu0 0.0
        %952 = vmatpush2.msra.mxu0 0.0
        %953 = vmatprep.subr.mxu0 0.0
        %954 = vmatpush2.msra.mxu0 0.0
        %955 = vmatprep.subr.mxu0 0.0
        %956 = vmatpush2.msra.mxu0 0.0
        %957 = vmatprep.subr.mxu0 0.0
        %958 = vmatpush2.msra.mxu0 0.0
        %959 = vmatprep.subr.mxu0 0.0
        %960 = vmatpush2.msra.mxu0 0.0
        %961 = vmatprep.subr.mxu0 0.0
        %962 = vmatpush2.msra.mxu0 0.0
        %963 = vmatprep.subr.mxu0 0.0
        %964 = vmatpush2.msra.mxu0 0.0
        %965 = vmatprep.subr.mxu0 0.0
        %966 = vmatpush2.msra.mxu0 0.0
        %967 = vmatprep.subr.mxu0 0.0
        %968 = vmatpush2.msra.mxu0 0.0
        %969 = vmatprep.subr.mxu0 0.0
        %970 = vmatpush2.msra.mxu0 0.0
        %971 = vmatprep.subr.mxu0 0.0
        %972 = vmatpush2.msra.mxu0 0.0
        %973 = vmatprep.subr.mxu0 0.0
        %974 = vmatpush2.msra.mxu0 0.0
        %975 = vmatprep.subr.mxu0 0.0
        %976 = vmatpush2.msra.mxu0 0.0
        %977 = vmatprep.subr.mxu0 0.0
        %978 = vmatpush2.msra.mxu0 0.0
        %979 = vmatprep.subr.mxu0 0.0
        %980 = vmatpush2.msra.mxu0 0.0
        %981 = vmatprep.subr.mxu0 0.0
        %982 = vmatpush2.msra.mxu0 0.0
        %983 = vmatprep.mubr.f32.mxu0 0.0
        %984 = vmatmul.mubr.f32.gmra.mxu0 %v847
        %v985 = vpop.f32.mrf.mxu0
        %v986 = vadd.f32 0.0, %v985
        %v987 = vpop.f32.mrf.mxu0
        %988 = vdwg.mxu0
        %v989 = vsub.f32 %v756, %v916
        %v990 = vsub.f32 %v757, %v986
        %v991 = vand.u32 2147483647, %v989
        %v992 = vand.u32 2147483647, %v990
        %vm993 = vcmp.lt.f32.partialorder %v991, 1.0
        %vm994 = vcmp.lt.f32.partialorder %v992, 1.0
        %v995 = vmul.f32 %v989, 0.5
        %v996 = vmul.f32 %v990, 0.5
        %v997 = vmul.f32 %v995, %v989
        %v998 = vmul.f32 %v996, %v990
        %v999 = vsub.f32 %v991, 0.5
        %v1000 = vsub.f32 %v992, 0.5
        %v1001 = vsel %vm993, %v997, %v999
        %v1002 = vsel %vm994, %v998, %v1000
        %vm1003 = vcmask 64512
        %v1004 = vsel %vm1003, %v1001, 0.0
        %v1005 = vsel %vm1003, %v1002, 0.0
        %v1006 = vadd.f32 %v1004, %v1005
        %1007 = vadd.xlane.f32.xlu0 %v1006
        %v1008 = vpop.xlane.xlu0 %1007
        %v1009 = vrot.slane %v1008, 4
        %v1010 = vadd.f32 %v1008, %v1009
        %v1011 = vrot.slane %v1010, 2
        %v1012 = vadd.f32 %v1010, %v1011
        %v1013 = vrot.slane %v1012, 1
        %v1014 = vadd.f32 %v1012, %v1013
        %s1015 = vtos %v1014
        %s1016 = smul.f32 %s1015, 0.0015625
        %v1017 = vstv %s1016
        %v1018 = vadd.f32 %v755, %v1017
        %v1019 = vld [vmem:[%s396] sm:$0xff]
        %v1020 = vld [vmem:[%s396 + $0x8] sm:$0xff]
        %v1021 = vld [vmem:[%s396 + $0x10] sm:$0xff]
        %v1022 = vld [vmem:[%s396 + $0x18] sm:$0xff]
        %v1023 = vsub.f32 %v1019, %v476
        %v1024 = vsub.f32 %v1020, %v477
        %v1025 = vsub.f32 %v1021, %v478
        %v1026 = vsub.f32 %v1022, %v479
        %v1027 = vand.u32 2147483647, %v1023
        %v1028 = vand.u32 2147483647, %v1024
        %v1029 = vand.u32 2147483647, %v1025
        %v1030 = vand.u32 2147483647, %v1026
        %vm1031 = vcmp.lt.f32.partialorder %v1027, 1.0
        %vm1032 = vcmp.lt.f32.partialorder %v1028, 1.0
        %vm1033 = vcmp.lt.f32.partialorder %v1029, 1.0
        %vm1034 = vcmp.lt.f32.partialorder %v1030, 1.0
        %v1035 = vmul.f32 %v1023, 0.5
        %v1036 = vmul.f32 %v1024, 0.5
        %v1037 = vmul.f32 %v1025, 0.5
        %v1038 = vmul.f32 %v1026, 0.5
        %v1039 = vmul.f32 %v1035, %v1023
        %v1040 = vmul.f32 %v1036, %v1024
        %v1041 = vmul.f32 %v1037, %v1025
        %v1042 = vmul.f32 %v1038, %v1026
        %v1043 = vsub.f32 %v1027, 0.5
        %v1044 = vsub.f32 %v1028, 0.5
        %v1045 = vsub.f32 %v1029, 0.5
        %v1046 = vsub.f32 %v1030, 0.5
        %v1047 = vsel %vm1031, %v1039, %v1043
        %v1048 = vsel %vm1032, %v1040, %v1044
        %v1049 = vsel %vm1033, %v1041, %v1045
        %v1050 = vsel %vm1034, %v1042, %v1046
        %v1051 = vsel %vm485, %v1047, 0.0
        %v1052 = vsel %vm485, %v1048, 0.0
        %v1053 = vadd.f32 %v1051, %v1052
        %v1054 = vsel %vm485, %v1049, 0.0
        %v1055 = vadd.f32 %v1053, %v1054
        %v1056 = vsel %vm485, %v1050, 0.0
        %v1057 = vadd.f32 %v1055, %v1056
        %1058 = vadd.xlane.f32.xlu0 %v1057
        %v1059 = vpop.xlane.xlu0 %1058
        %v1060 = vrot.slane %v1059, 4
        %v1061 = vadd.f32 %v1059, %v1060
        %v1062 = vrot.slane %v1061, 2
        %v1063 = vadd.f32 %v1061, %v1062
        %v1064 = vrot.slane %v1063, 1
        %v1065 = vadd.f32 %v1063, %v1064
        %s1066 = vtos %v1065
        %s1067 = smul.f32 %s1066, 0.00048828125
        %v1068 = vstv %s1067
        %v1069 = vadd.f32 %v1018, %v1068
        %v1070 = vld [vmem:[%s405] sm:$0xff]
        %v1071 = vld [vmem:[%s405 + $0x8] sm:$0xff]
        %v1072 = vld [vmem:[%s405 + $0x10] sm:$0xff]
        %v1073 = vld [vmem:[%s405 + $0x18] sm:$0xff]
        %v1074 = vsub.f32 %v1070, %v476
        %v1075 = vsub.f32 %v1071, %v477
        %v1076 = vsub.f32 %v1072, %v478
        %v1077 = vsub.f32 %v1073, %v479
        %v1078 = vand.u32 2147483647, %v1074
        %v1079 = vand.u32 2147483647, %v1075
        %v1080 = vand.u32 2147483647, %v1076
        %v1081 = vand.u32 2147483647, %v1077
        %vm1082 = vcmp.lt.f32.partialorder %v1078, 1.0
        %vm1083 = vcmp.lt.f32.partialorder %v1079, 1.0
        %vm1084 = vcmp.lt.f32.partialorder %v1080, 1.0
        %vm1085 = vcmp.lt.f32.partialorder %v1081, 1.0
        %v1086 = vmul.f32 %v1074, 0.5
        %v1087 = vmul.f32 %v1075, 0.5
        %v1088 = vmul.f32 %v1076, 0.5
        %v1089 = vmul.f32 %v1077, 0.5
        %v1090 = vmul.f32 %v1086, %v1074
        %v1091 = vmul.f32 %v1087, %v1075
        %v1092 = vmul.f32 %v1088, %v1076
        %v1093 = vmul.f32 %v1089, %v1077
        %v1094 = vsub.f32 %v1078, 0.5
        %v1095 = vsub.f32 %v1079, 0.5
        %v1096 = vsub.f32 %v1080, 0.5
        %v1097 = vsub.f32 %v1081, 0.5
        %v1098 = vsel %vm1082, %v1090, %v1094
        %v1099 = vsel %vm1083, %v1091, %v1095
        %v1100 = vsel %vm1084, %v1092, %v1096
        %v1101 = vsel %vm1085, %v1093, %v1097
        %v1102 = vsel %vm485, %v1098, 0.0
        %v1103 = vsel %vm485, %v1099, 0.0
        %v1104 = vadd.f32 %v1102, %v1103
        %v1105 = vsel %vm485, %v1100, 0.0
        %v1106 = vadd.f32 %v1104, %v1105
        %v1107 = vsel %vm485, %v1101, 0.0
        %v1108 = vadd.f32 %v1106, %v1107
        %1109 = vadd.xlane.f32.xlu0 %v1108
        %v1110 = vpop.xlane.xlu0 %1109
        %v1111 = vrot.slane %v1110, 4
        %v1112 = vadd.f32 %v1110, %v1111
        %v1113 = vrot.slane %v1112, 2
        %v1114 = vadd.f32 %v1112, %v1113
        %v1115 = vrot.slane %v1114, 1
        %v1116 = vadd.f32 %v1114, %v1115
        %s1117 = vtos %v1116
        %s1118 = smul.f32 %s1117, 0.00048828125
        %v1119 = vstv %s1118
        %v1120 = vadd.f32 %v1069, %v1119
        %vm1121 = vcmask 0
        %1122 = vst.msk [vmem:[%s475] sm:$0x1] %vm1121, %v1120
        %p1123 = scmp.lt.s32.totalorder %s26, 3
        %s1124 = scalar_select %p1123, %s26, 3
        %s1125 = scalar_lea.vmem %s9, %s1124
        // Predicated region
        $region69: #{tpu_custom_call.1} parent=55 // pred_check
          %p1126 = pneg %p258
        $region70: #{tpu_custom_call.1} parent=55 // pred_check_branch
          %1128 = sbr.rel (%p1126) target = $region72
        $region71: #{tpu_custom_call.1} parent=55 // pred_region
          _
        $region72: #{tpu_custom_call.1} parent=55 // pred_fallthru
          _
      $region56: #{tpu_custom_call.1} parent=5 // pred_fallthru
        _
      %p1129 = scmp.le.s32.totalorder 2, %s21
      // Predicated region
      $region73: #{tpu_custom_call.1} parent=5 // pred_check
        %p1130 = pneg %p1129
      $region74: #{tpu_custom_call.1} parent=5 // pred_check_branch
        %1132 = sbr.rel (%p1130) target = $region76
      $region75: #{tpu_custom_call.1} parent=5 // pred_region
        %s1133 = ssub.s32 %s21, 2
        // Predicated region
        $region77: #{tpu_custom_call.1} parent=75 // pred_check
          %p1134 = pneg %p264
        $region78: #{tpu_custom_call.1} parent=75 // pred_check_branch
          %1136 = sbr.rel (%p1134) target = $region80
        $region79: #{tpu_custom_call.1} parent=75 // pred_region
          %p1137 = scmp.lt.s32.totalorder %s27, 3
          %s1138 = scalar_select %p1137, %s27, 3
          %s1139 = scalar_lea.vmem %s9, %s1138
        $region80: #{tpu_custom_call.1} parent=75 // pred_fallthru
          _
      $region76: #{tpu_custom_call.1} parent=5 // pred_fallthru
        _
    $region6: #{tpu_custom_call.1} parent=1 // loop_footer
      %s25 = sadd.s32 1, %s21
    $region7: #{tpu_custom_call.1} parent=1 // loop_footer_branch
      %20 = sbr.rel target = $region3
    $region8: #{tpu_custom_call.1} parent=1 // loop_exit
      _
    %1140 = vsyncpa [#allocation3], 1
    %s1141 = scalar_lea.sflag [#allocation3], 1
    %1142 = vsyncpa %s1141, 1
    %1143 = vsyncpa [#allocation5], 1
    %s1144 = scalar_lea.sflag [#allocation5], 1
    %1145 = vsyncpa %s1144, 1

</llo_original>
